<compile_context>
chip_gen: v6e
topology: v6e:2x2x1
jax: 0.10.0
libtpu: 0.0.40
codegen_flags: <defaults>
</compile_context>

<pallas_src>
import functools
import math

import jax
import jax.numpy as jnp
from jax.experimental import pallas as pl
from jax.experimental.pallas import tpu as pltpu


def _make_freq_bands(max_freq_log2, n_freqs, log_sampling=True):
    # Deterministic "parameters" of the module (no learned weights); baked as
    # compile-time Python floats, exactly like the torch module stores them.
    if n_freqs <= 0:
        return []
    if log_sampling:
        bands = 2.0 ** jnp.linspace(0.0, max_freq_log2, n_freqs)
    else:
        bands = jnp.linspace(2.0 ** 0.0, 2.0 ** max_freq_log2, n_freqs)
    return [float(f) for f in bands]


def _round_up(a, b):
    return ((a + b - 1) // b) * b


def _embedder_kernel(scale_ref, phase_ref, x_ref, out_ref, *, input_dim,
                     include_input):
    # Channels-last tiles:
    #   x_ref     : [tile_rows, input_dim]
    #   out_ref   : [tile_rows, out_dim]
    #   scale/phase: [1, 2*n_freqs*input_dim], broadcast along the row axis.
    x = x_ref[...].astype(jnp.float32)            # compute in f32 (v5e-safe)
    n_ch = scale_ref.shape[-1]                    # 2 * n_freqs * input_dim
    n_rep = n_ch // input_dim

    base = input_dim if include_input else 0

    # Replicate input channels, then ONE wide sin in final channel order:
    #   z[:, c] = x[:, c % d] * freq[c // (2d)] + (pi/2 if cos-channel else 0)
    x_rep = jnp.concatenate([x] * n_rep, axis=-1)                 # [rows, n_ch]
    z = x_rep * scale_ref[...] + phase_ref[...]
    out_ref[:, pl.ds(base, n_ch)] = jnp.sin(z).astype(out_ref.dtype)

    if include_input:
        out_ref[:, pl.ds(0, input_dim)] = x.astype(out_ref.dtype)


def embedder_forward(x, *, max_freq_log2, n_freqs, log_sampling=True,
                     include_input=True, tile_rows=4096, out_dtype=None):
    """x: [..., input_dim] -> [..., out_dim] (same semantics as the nn.Module).

    `out_dtype` lets a consumer request e.g. bf16 output (compute stays f32);
    default keeps the module semantics (output dtype == input dtype).
    """
    input_dim = x.shape[-1]
    freq_bands = _make_freq_bands(max_freq_log2, n_freqs, log_sampling)
    out_dim = (input_dim if include_input else 0) + input_dim * len(freq_bands) * 2
    if out_dim == 0:
        raise ValueError(
            "Embedder with N_freqs=0 and include_input=False has out_dim=0.")
    out_dtype = x.dtype if out_dtype is None else out_dtype

    if len(freq_bands) == 0:
        # torch.cat([input], dim=-1) == input
        return x.astype(out_dtype)

    lead_shape = x.shape[:-1]
    rows = 1
    for s in lead_shape:
        rows *= int(s)
    x2d = x.reshape(rows, input_dim)

    # Per-channel frequency scale & phase in the module's channel order:
    # [sin f0 (d ch), cos f0 (d ch), sin f1, cos f1, ...];  cos(z)=sin(z+pi/2).
    n_ch = 2 * len(freq_bands) * input_dim
    scales, phases = [], []
    for f in freq_bands:
        scales.extend([f] * input_dim + [f] * input_dim)
        phases.extend([0.0] * input_dim + [math.pi / 2.0] * input_dim)
    scale = jnp.asarray(scales, dtype=jnp.float32).reshape(1, n_ch)
    phase = jnp.asarray(phases, dtype=jnp.float32).reshape(1, n_ch)

    # Row tile (sublane axis): multiple of 8, large enough to amortize the
    # ~0.35us per-grid-step overhead, small enough to double-buffer in VMEM
    # (narrow last dims pad to 128 lanes in VMEM, so blocks cost tr*128*4 B).
    tr = max(8, min(_round_up(tile_rows, 8), _round_up(rows, 8)))
    # Ensure >= 2 grid steps for non-trivial inputs so ("parallel",) can shard
    # the grid across both v7x TensorCores.
    if rows > 2048:
        tr = min(tr, _round_up(pl.cdiv(rows, 2), 8))
    grid = (pl.cdiv(rows, tr),)      # ragged last block is masked by Pallas

    kernel = functools.partial(_embedder_kernel, input_dim=input_dim,
                               include_input=include_input)

    cost = pl.CostEstimate(
        flops=2 * rows * n_ch,
        transcendentals=rows * n_ch,
        bytes_accessed=rows * input_dim * jnp.dtype(x.dtype).itemsize
        + rows * out_dim * jnp.dtype(out_dtype).itemsize,
    )

    out2d = pl.pallas_call(
        kernel,
        out_shape=jax.ShapeDtypeStruct((rows, out_dim), out_dtype),
        grid_spec=pltpu.PrefetchScalarGridSpec(
            num_scalar_prefetch=0,
            grid=grid,
            in_specs=[
                # Small per-channel constants, same block for every grid step.
                pl.BlockSpec((1, n_ch), lambda i: (0, 0)),
                pl.BlockSpec((1, n_ch), lambda i: (0, 0)),
                # Last block dim equals the full array dim; second-last is a
                # multiple of 8 -> valid TPU tiles, channels-last, no transpose.
                pl.BlockSpec((tr, input_dim), lambda i: (i, 0)),
            ],
            out_specs=pl.BlockSpec((tr, out_dim), lambda i: (i, 0)),
        ),
        compiler_params=pltpu.CompilerParams(
            dimension_semantics=("parallel",)),
        cost_estimate=cost,
    )(scale, phase, x2d)

    return out2d.reshape(*lead_shape, out_dim)


def embedder_reference(x, *, max_freq_log2, n_freqs, log_sampling=True,
                       include_input=True):
    """Pure-JAX reference mirroring the PyTorch forward."""
    freq_bands = _make_freq_bands(max_freq_log2, n_freqs, log_sampling)
    out = []
    if include_input:
        out.append(x)
    for freq in freq_bands:
        out.append(jnp.sin(x * freq))
        out.append(jnp.cos(x * freq))
    return jnp.concatenate(out, axis=-1)


if __name__ == "__main__":
    # Small, module-consistent config: NeRF-like xyz embedding.
    input_dim = 3
    max_freq_log2 = 3.0
    n_freqs = 4
    batch, seq = 2, 8  # leading dims, flattened to 16 rows inside the wrapper

    key = jax.random.PRNGKey(0)
    x = jax.random.normal(key, (batch, seq, input_dim), dtype=jnp.float32)

    out = embedder_forward(
        x, max_freq_log2=max_freq_log2, n_freqs=n_freqs,
        log_sampling=True, include_input=True)
    out = jax.block_until_ready(out)

    ref = embedder_reference(
        x, max_freq_log2=max_freq_log2, n_freqs=n_freqs,
        log_sampling=True, include_input=True)

    expected_out_dim = input_dim + input_dim * n_freqs * 2
    assert out.shape == (batch, seq, expected_out_dim), out.shape
    assert jnp.allclose(out, ref, atol=1e-5, rtol=1e-5)

    # Ragged row count (5*7 = 35, not a multiple of 8) to exercise the masked
    # tail block explicitly.
    x2 = jax.random.normal(jax.random.PRNGKey(1), (5, 7, input_dim),
                           dtype=jnp.float32)
    out2 = jax.block_until_ready(embedder_forward(
        x2, max_freq_log2=max_freq_log2, n_freqs=n_freqs,
        log_sampling=True, include_input=True))
    ref2 = embedder_reference(
        x2, max_freq_log2=max_freq_log2, n_freqs=n_freqs,
        log_sampling=True, include_input=True)
    assert out2.shape == (5, 7, expected_out_dim), out2.shape
    assert jnp.allclose(out2, ref2, atol=1e-5, rtol=1e-5)

    print("KERNEL_OK")
</pallas_src>

<mosaic_0001>
module attributes {stable_mosaic.version = 11 : i64} {
  func.func @_embedder_kernel(%arg0: i32, %arg1: memref<1x24xf32, #tpu.memory_space<vmem>>, %arg2: memref<1x24xf32, #tpu.memory_space<vmem>>, %arg3: memref<16x3xf32, #tpu.memory_space<vmem>>, %arg4: memref<16x27xf32, #tpu.memory_space<vmem>>) attributes {dimension_semantics = [#tpu.dimension_semantics<parallel>], iteration_bounds = array<i64: 1>, scalar_prefetch = 0 : i64, scratch_operands = 0 : i64, tpu.core_type = #tpu.core_type<tc>, window_params = [{pipeline_mode = #tpu.pipeline_mode<synchronous>, transform_indices = @transform_0, window_bounds = array<i64: 1, 24>}, {pipeline_mode = #tpu.pipeline_mode<synchronous>, transform_indices = @transform_1, window_bounds = array<i64: 1, 24>}, {transform_indices = @transform_2, window_bounds = array<i64: 16, 3>}, {transform_indices = @transform_3, window_bounds = array<i64: 16, 27>}]} {
    %c0 = arith.constant 0 : index
    %c0_0 = arith.constant 0 : index
    %0 = vector.load %arg3[%c0, %c0_0] : memref<16x3xf32, #tpu.memory_space<vmem>>, vector<16x3xf32>
    %1 = tpu.concatenate %0, %0, %0, %0, %0, %0, %0, %0 in 1 : vector<16x3xf32>, vector<16x3xf32>, vector<16x3xf32>, vector<16x3xf32>, vector<16x3xf32>, vector<16x3xf32>, vector<16x3xf32>, vector<16x3xf32> -> vector<16x24xf32>
    %c0_1 = arith.constant 0 : index
    %c0_2 = arith.constant 0 : index
    %2 = vector.load %arg1[%c0_1, %c0_2] : memref<1x24xf32, #tpu.memory_space<vmem>>, vector<1x24xf32>
    %3 = vector.broadcast %2 : vector<1x24xf32> to vector<16x24xf32>
    %4 = arith.mulf %1, %3 : vector<16x24xf32>
    %c0_3 = arith.constant 0 : index
    %c0_4 = arith.constant 0 : index
    %5 = vector.load %arg2[%c0_3, %c0_4] : memref<1x24xf32, #tpu.memory_space<vmem>>, vector<1x24xf32>
    %6 = vector.broadcast %5 : vector<1x24xf32> to vector<16x24xf32>
    %7 = arith.addf %4, %6 : vector<16x24xf32>
    %8 = math.sin %7 : vector<16x24xf32>
    %c0_5 = arith.constant 0 : index
    %c3 = arith.constant 3 : index
    %9 = vector.load %arg4[%c0_5, %c3] : memref<16x27xf32, #tpu.memory_space<vmem>>, vector<16x24xf32>
    tpu.vector_store %arg4[%c0_5, %c3], %8 {strides = array<i32>} : memref<16x27xf32, #tpu.memory_space<vmem>>, vector<16x24xf32>,
    %c0_6 = arith.constant 0 : index
    %c0_7 = arith.constant 0 : index
    %10 = vector.load %arg4[%c0_6, %c0_7] : memref<16x27xf32, #tpu.memory_space<vmem>>, vector<16x3xf32>
    tpu.vector_store %arg4[%c0_6, %c0_7], %0 {strides = array<i32>} : memref<16x27xf32, #tpu.memory_space<vmem>>, vector<16x3xf32>,
    return
  }
  func.func @transform_0(%arg0: i32) -> (i32, i32) {
    %c0_i32 = arith.constant 0 : i32
    %c0_i32_0 = arith.constant 0 : i32
    %c0_i32_1 = arith.constant 0 : i32
    return %c0_i32, %c0_i32_0 : i32, i32
  }
  func.func @transform_1(%arg0: i32) -> (i32, i32) {
    %c0_i32 = arith.constant 0 : i32
    %c0_i32_0 = arith.constant 0 : i32
    %c0_i32_1 = arith.constant 0 : i32
    return %c0_i32, %c0_i32_0 : i32, i32
  }
  func.func @transform_2(%arg0: i32) -> (i32, i32) {
    %c0_i32 = arith.constant 0 : i32
    %c0_i32_0 = arith.constant 0 : i32
    return %arg0, %c0_i32 : i32, i32
  }
  func.func @transform_3(%arg0: i32) -> (i32, i32) {
    %c0_i32 = arith.constant 0 : i32
    %c0_i32_0 = arith.constant 0 : i32
    return %arg0, %c0_i32 : i32, i32
  }
}

</mosaic_0001>

<llo_original>
// kernel: tpu_custom_call.1
$region0: #{tpu_custom_call.1}
  #allocation0 [shape = 'u32[]', space=smem, size = 0x4, offset = 0x4, fixed_abs, tag = 'smem constant byte address 0x4 - core index']
  #allocation1 [shape = 'u32[144,128]{1,0:T(1,128)}', space=vmem, size = 0x12000, scoped, tag = 'internal scratch']
  %s0 = inlined_call_operand.vmem [shape: f32[1,24], index: 0, kind: input, shape index: {}]
  %s1 = inlined_call_operand.vmem [shape: f32[1,24], index: 1, kind: input, shape index: {}]
  %s2 = inlined_call_operand.vmem [shape: f32[16,3], index: 2, kind: input, shape index: {}]
  %s3 = inlined_call_operand.hbm [shape: f32[16,27], index: 3, kind: output, shape index: {}]
  %s4 = sld [smem:[#allocation0]]
  $region22: #{tpu_custom_call.1} parent=0
    _
  %s6 = ssub.s32 1, %s4
  %s7 = scalar_select 0, %s6, %s4
  $region1: #{tpu_custom_call.1} parent=0
    #allocation2 [shape = 'u8[8192]{0}', space=vmem, size = 0x2000, scoped, tag = 'output window, operand 0, single buffered']
    #allocation3 [shape = 's32[1]{0}', space=sflag, size = 0x4, scoped, tag = 'scoped memory for tpu_custom_call.1']
    %8 = vsyncpa [#allocation3], 0
    // Predicated region
    $region2: #{tpu_custom_call.1} parent=1 // pred_check
      _
    $region3: #{tpu_custom_call.1} parent=1 // pred_check_branch
      %10 = sbr.rel (0) target = $region5
    $region4: #{tpu_custom_call.1} parent=1 // pred_region
      _
    $region5: #{tpu_custom_call.1} parent=1 // pred_fallthru
      _
    // Predicated region
    $region6: #{tpu_custom_call.1} parent=1 // pred_check
      _
    $region7: #{tpu_custom_call.1} parent=1 // pred_check_branch
      %12 = sbr.rel (0) target = $region9
    $region8: #{tpu_custom_call.1} parent=1 // pred_region
      _
    $region9: #{tpu_custom_call.1} parent=1 // pred_fallthru
      _
    // Predicated region
    $region10: #{tpu_custom_call.1} parent=1 // pred_check
      _
    $region11: #{tpu_custom_call.1} parent=1 // pred_check_branch
      %14 = sbr.rel (0) target = $region13
    $region12: #{tpu_custom_call.1} parent=1 // pred_region
      _
    $region13: #{tpu_custom_call.1} parent=1 // pred_fallthru
      _
    %v15 = vld [vmem:[%s2] sm:$0xff]
    %v16 = vld [vmem:[%s2 + $0x8] sm:$0xff]
    %19 = vrot.lane.b32.xlu0 %v15, 3
    %v20 = vpop.permute.xlu0 %19
    %21 = vrot.lane.b32.xlu0 %v16, 3
    %v22 = vpop.permute.xlu0 %21
    %25 = vrot.lane.b32.xlu0 %v15, 6
    %v26 = vpop.permute.xlu0 %25
    %27 = vrot.lane.b32.xlu0 %v16, 6
    %v28 = vpop.permute.xlu0 %27
    %31 = vrot.lane.b32.xlu0 %v15, 9
    %v32 = vpop.permute.xlu0 %31
    %33 = vrot.lane.b32.xlu0 %v16, 9
    %v34 = vpop.permute.xlu0 %33
    %37 = vrot.lane.b32.xlu0 %v15, 12
    %v38 = vpop.permute.xlu0 %37
    %39 = vrot.lane.b32.xlu0 %v16, 12
    %v40 = vpop.permute.xlu0 %39
    %43 = vrot.lane.b32.xlu0 %v15, 15
    %v44 = vpop.permute.xlu0 %43
    %45 = vrot.lane.b32.xlu0 %v16, 15
    %v46 = vpop.permute.xlu0 %45
    %49 = vrot.lane.b32.xlu0 %v15, 18
    %v50 = vpop.permute.xlu0 %49
    %51 = vrot.lane.b32.xlu0 %v16, 18
    %v52 = vpop.permute.xlu0 %51
    %55 = vrot.lane.b32.xlu0 %v15, 21
    %v56 = vpop.permute.xlu0 %55
    %57 = vrot.lane.b32.xlu0 %v16, 21
    %v58 = vpop.permute.xlu0 %57
    %vm61 = vcmask 23552
    %v62 = vsel %vm61, %v15, %v20
    %v63 = vsel %vm61, %v16, %v22
    %vm64 = vcmask 48128
    %v65 = vsel %vm64, %v62, %v26
    %v66 = vsel %vm64, %v63, %v28
    %vm67 = vcmask 72704
    %v68 = vsel %vm67, %v65, %v32
    %v69 = vsel %vm67, %v66, %v34
    %vm70 = vcmask 97280
    %v71 = vsel %vm70, %v68, %v38
    %v72 = vsel %vm70, %v69, %v40
    %vm73 = vcmask 121856
    %v74 = vsel %vm73, %v71, %v44
    %v75 = vsel %vm73, %v72, %v46
    %vm76 = vcmask 146432
    %v77 = vsel %vm76, %v74, %v50
    %v78 = vsel %vm76, %v75, %v52
    %vm79 = vcmask 171008
    %v80 = vsel %vm79, %v77, %v56
    %v81 = vsel %vm79, %v78, %v58
    %v82 = vld [vmem:[%s0] sm:$0x1]
    %v84 = vlaneseq
    %v85 = vshrl.u32 %v84, 7
    %v86 = vsub.s32 0, %v85
    %v87 = vrot.slane %v82, %v86
    %v89 = vmul.f32 %v80, %v87
    %v90 = vmul.f32 %v81, %v87
    %v91 = vld [vmem:[%s1] sm:$0x1]
    %v93 = vlaneseq
    %v94 = vshrl.u32 %v93, 7
    %v95 = vsub.s32 0, %v94
    %v96 = vrot.slane %v91, %v95
    %v98 = vadd.f32 %v89, %v96
    %v99 = vadd.f32 %v90, %v96
    %v100 = vand.u32 2147483647, %v98
    %vm101 = vcmp.le.f32.partialorder %v100, 0.7853982
    %vm102 = vcmp.lt.s32.totalorder %v98, 0
    %v103 = vand.u32 %v98, 2139095040
    %v104 = vshrl.u32 %v103, 23
    %v105 = vsub.s32 %v104, 127
    %v106 = vand.u32 2147483647, %v98
    %v107 = vand.u32 %v106, 8388607
    %v108 = vor.u32 %v107, 8388608
    %v109 = vsub.s32 0, %v108
    %v110 = vadd.s32 %v105, 1
    %vm111 = vcmp.gt.s32.totalorder %v110, 0
    %v112 = vsel %vm111, %v110, 0
    %v113 = vshrl.u32 %v112, 5
    %v114 = vand.u32 %v112, 31
    %v115 = vsub.s32 32, %v114
    %v116 = vshrl.u32 683565275, %v115
    %v117 = vshll.u32 683565275, %v114
    %v118 = vshrl.u32 2475754826, %v115
    %v119 = vor.u32 %v117, %v118
    %v120 = vshll.u32 2475754826, %v114
    %v121 = vshrl.u32 2131351028, %v115
    %v122 = vor.u32 %v120, %v121
    %v123 = vshll.u32 2131351028, %v114
    %v124 = vshrl.u32 2102212464, %v115
    %v125 = vor.u32 %v123, %v124
    %v126 = vshll.u32 2102212464, %v114
    %v127 = vshrl.u32 920167782, %v115
    %v128 = vor.u32 %v126, %v127
    %v129 = vshll.u32 920167782, %v114
    %v130 = vshrl.u32 1326507024, %v115
    %v131 = vor.u32 %v129, %v130
    %vm132 = vcmp.lt.s32.totalorder %v113, 1
    %vm133 = vcmp.lt.s32.totalorder %v113, 2
    %vm134 = vcmp.lt.s32.totalorder %v113, 3
    %vm135 = vcmp.lt.s32.totalorder %v113, 4
    %v136 = vsel %vm132, %v116, %v119
    %v137 = vsel %vm135, %v125, 2102212464
    %v138 = vsel %vm134, %v122, %v137
    %v139 = vsel %vm133, %v136, %v138
    %v140 = vsel %vm132, %v119, %v122
    %v141 = vsel %vm135, %v128, 920167782
    %v142 = vsel %vm134, %v125, %v141
    %v143 = vsel %vm133, %v140, %v142
    %v144 = vsel %vm132, %v122, %v125
    %v145 = vsel %vm135, %v131, 1326507024
    %v146 = vsel %vm134, %v128, %v145
    %v147 = vsel %vm133, %v144, %v146
    %v148 = vshll.u32 %v108, 8
    %v149 = vmul.u32.u64.compose %v148, %v147
    %v150 = vextract.low.u32 %v149
    %v151 = vextract.high.u32 %v149
    %v152 = vmul.u32.u64.compose %v148, %v143
    %v153 = vextract.low.u32 %v152
    %v154 = vextract.high.u32 %v152
    %v155 = vmul.u32 %v148, %v139
    %v156 = vadd.s32 %v151, %v153
    %vm157 = vc.u32 %v151, %v153
    %v158 = vadd.s32 %v154, 1
    %v159 = vsel %vm157, %v158, %v154
    %v160 = vadd.s32 %v155, %v159
    %v161 = vadd.s32 %v160, 536870912
    %v162 = vshrl.u32 %v161, 30
    %v163 = vshll.u32 %v162, 30
    %v164 = vsub.s32 %v160, %v163
    %vm165 = vcmp.lt.s32.totalorder %v164, 0
    %v166 = vsub.s32 0, %v164
    %v167 = vsel %vm165, %v166, %v164
    %v168 = vclz %v167
    %v169 = vsub.s32 %v168, 2
    %vm170 = vcmp.gt.s32.totalorder 0, %v169
    %v171 = vsel %vm170, 0, %v169
    %v172 = vsub.s32 32, %v171
    %v173 = vshll.u32 %v164, %v171
    %v174 = vshrl.u32 %v156, %v172
    %v175 = vor.u32 %v173, %v174
    %v176 = vsub.s32 4294967266, %v171
    %v177 = vadd.s32 %v176, 127
    %v178 = vshll.u32 %v177, 23
    %v179 = vor.u32 4788187, %v178
    %v180 = vand.u32 2147483647, %v179
    %v182 = vcvt.s32.f32 %v175
    %v183 = vmul.f32 %v182, %v180
    %v184 = vxor.u32 %v183, 2147483648
    %v185 = vsel %vm102, %v184, %v183
    %v186 = vsub.s32 4, %v162
    %v187 = vsel %vm102, %v186, %v162
    %v188 = vsel %vm101, %v98, %v185
    %v189 = vsel %vm101, 0, %v187
    %v190 = vcosq.f32.pop %v188
    %v191 = vsinq.f32.pop %v188
    %vm192 = vweird.f32 %v98
    %v193 = vadd.s32 %v189, 3
    %v194 = vand.u32 %v193, 3
    %vm195 = vcmp.lt.s32.totalorder %v194, 2
    %vm196 = vcmp.eq.s32.totalorder %v194, 0
    %v197 = vxor.u32 %v191, 2147483648
    %v198 = vsel %vm196, %v190, %v197
    %vm199 = vcmp.eq.s32.totalorder %v194, 2
    %v200 = vxor.u32 %v190, 2147483648
    %v201 = vsel %vm199, %v200, %v191
    %v202 = vsel %vm195, %v198, %v201
    %v203 = vsel %vm192, nan, %v202
    %v204 = vand.u32 2147483647, %v99
    %vm205 = vcmp.le.f32.partialorder %v204, 0.7853982
    %vm206 = vcmp.lt.s32.totalorder %v99, 0
    %v207 = vand.u32 %v99, 2139095040
    %v208 = vshrl.u32 %v207, 23
    %v209 = vsub.s32 %v208, 127
    %v210 = vand.u32 2147483647, %v99
    %v211 = vand.u32 %v210, 8388607
    %v212 = vor.u32 %v211, 8388608
    %v213 = vsub.s32 0, %v212
    %v214 = vadd.s32 %v209, 1
    %vm215 = vcmp.gt.s32.totalorder %v214, 0
    %v216 = vsel %vm215, %v214, 0
    %v217 = vshrl.u32 %v216, 5
    %v218 = vand.u32 %v216, 31
    %v219 = vsub.s32 32, %v218
    %v220 = vshrl.u32 683565275, %v219
    %v221 = vshll.u32 683565275, %v218
    %v222 = vshrl.u32 2475754826, %v219
    %v223 = vor.u32 %v221, %v222
    %v224 = vshll.u32 2475754826, %v218
    %v225 = vshrl.u32 2131351028, %v219
    %v226 = vor.u32 %v224, %v225
    %v227 = vshll.u32 2131351028, %v218
    %v228 = vshrl.u32 2102212464, %v219
    %v229 = vor.u32 %v227, %v228
    %v230 = vshll.u32 2102212464, %v218
    %v231 = vshrl.u32 920167782, %v219
    %v232 = vor.u32 %v230, %v231
    %v233 = vshll.u32 920167782, %v218
    %v234 = vshrl.u32 1326507024, %v219
    %v235 = vor.u32 %v233, %v234
    %vm236 = vcmp.lt.s32.totalorder %v217, 1
    %vm237 = vcmp.lt.s32.totalorder %v217, 2
    %vm238 = vcmp.lt.s32.totalorder %v217, 3
    %vm239 = vcmp.lt.s32.totalorder %v217, 4
    %v240 = vsel %vm236, %v220, %v223
    %v241 = vsel %vm239, %v229, 2102212464
    %v242 = vsel %vm238, %v226, %v241
    %v243 = vsel %vm237, %v240, %v242
    %v244 = vsel %vm236, %v223, %v226
    %v245 = vsel %vm239, %v232, 920167782
    %v246 = vsel %vm238, %v229, %v245
    %v247 = vsel %vm237, %v244, %v246
    %v248 = vsel %vm236, %v226, %v229
    %v249 = vsel %vm239, %v235, 1326507024
    %v250 = vsel %vm238, %v232, %v249
    %v251 = vsel %vm237, %v248, %v250
    %v252 = vshll.u32 %v212, 8
    %v253 = vmul.u32.u64.compose %v252, %v251
    %v254 = vextract.low.u32 %v253
    %v255 = vextract.high.u32 %v253
    %v256 = vmul.u32.u64.compose %v252, %v247
    %v257 = vextract.low.u32 %v256
    %v258 = vextract.high.u32 %v256
    %v259 = vmul.u32 %v252, %v243
    %v260 = vadd.s32 %v255, %v257
    %vm261 = vc.u32 %v255, %v257
    %v262 = vadd.s32 %v258, 1
    %v263 = vsel %vm261, %v262, %v258
    %v264 = vadd.s32 %v259, %v263
    %v265 = vadd.s32 %v264, 536870912
    %v266 = vshrl.u32 %v265, 30
    %v267 = vshll.u32 %v266, 30
    %v268 = vsub.s32 %v264, %v267
    %vm269 = vcmp.lt.s32.totalorder %v268, 0
    %v270 = vsub.s32 0, %v268
    %v271 = vsel %vm269, %v270, %v268
    %v272 = vclz %v271
    %v273 = vsub.s32 %v272, 2
    %vm274 = vcmp.gt.s32.totalorder 0, %v273
    %v275 = vsel %vm274, 0, %v273
    %v276 = vsub.s32 32, %v275
    %v277 = vshll.u32 %v268, %v275
    %v278 = vshrl.u32 %v260, %v276
    %v279 = vor.u32 %v277, %v278
    %v280 = vsub.s32 4294967266, %v275
    %v281 = vadd.s32 %v280, 127
    %v282 = vshll.u32 %v281, 23
    %v283 = vor.u32 4788187, %v282
    %v284 = vand.u32 2147483647, %v283
    %v286 = vcvt.s32.f32 %v279
    %v287 = vmul.f32 %v286, %v284
    %v288 = vxor.u32 %v287, 2147483648
    %v289 = vsel %vm206, %v288, %v287
    %v290 = vsub.s32 4, %v266
    %v291 = vsel %vm206, %v290, %v266
    %v292 = vsel %vm205, %v99, %v289
    %v293 = vsel %vm205, 0, %v291
    %v294 = vcosq.f32.pop %v292
    %v295 = vsinq.f32.pop %v292
    %vm296 = vweird.f32 %v99
    %v297 = vadd.s32 %v293, 3
    %v298 = vand.u32 %v297, 3
    %vm299 = vcmp.lt.s32.totalorder %v298, 2
    %vm300 = vcmp.eq.s32.totalorder %v298, 0
    %v301 = vxor.u32 %v295, 2147483648
    %v302 = vsel %vm300, %v294, %v301
    %vm303 = vcmp.eq.s32.totalorder %v298, 2
    %v304 = vxor.u32 %v294, 2147483648
    %v305 = vsel %vm303, %v304, %v295
    %v306 = vsel %vm299, %v302, %v305
    %v307 = vsel %vm296, nan, %v306
    %310 = vrot.lane.b32.xlu0 %v203, 3
    %v311 = vpop.permute.xlu0 %310
    %312 = vrot.lane.b32.xlu0 %v307, 3
    %v313 = vpop.permute.xlu0 %312
    %vm316 = vcmask 220184
    %317 = vst.msk [vmem:[#allocation2] sm:$0xff] %vm316, %v311
    %318 = vst.msk [vmem:[#allocation2 + $0x8] sm:$0xff] %vm316, %v313
    %319 = vst.msk [vmem:[#allocation2] sm:$0xff] %vm61, %v15
    %320 = vst.msk [vmem:[#allocation2 + $0x8] sm:$0xff] %vm61, %v16
    // Predicated region
    $region14: #{tpu_custom_call.1} parent=1 // pred_check
      _
    $region15: #{tpu_custom_call.1} parent=1 // pred_check_branch
      %322 = sbr.rel (0) target = $region17
    $region16: #{tpu_custom_call.1} parent=1 // pred_region
      %s324 = ssub.s32 256, 256
      %325 = vsyncadd [#allocation3], %s324
      %s326 = sshll.u32 [#allocation2], 4
      %s327 = int_to_ptr.vmem [resolvable:$true] %s326
      %332 = dma.vmem_to_hbm [thread:$0]  %s327, 256, %s3, [#allocation3], 128, 128, 8
    $region17: #{tpu_custom_call.1} parent=1 // pred_fallthru
      _
    // Predicated region
    $region18: #{tpu_custom_call.1} parent=1 // pred_check
      _
    $region19: #{tpu_custom_call.1} parent=1 // pred_check_branch
      %334 = sbr.rel (0) target = $region21
    $region20: #{tpu_custom_call.1} parent=1 // pred_region
      %335 = dma.done [#allocation3], 256
    $region21: #{tpu_custom_call.1} parent=1 // pred_fallthru
      _
    %336 = vsyncpa [#allocation3], 1

</llo_original>
